<compile_context>
chip_gen: v7x
topology: tpu7x:2x2x1
jax: 0.10.0
libtpu: 0.0.40
codegen_flags: <defaults>
</compile_context>

<pallas_src>
import jax
import jax.numpy as jnp
from jax.experimental import pallas as pl
from jax.experimental.pallas import tpu as pltpu


def _pick_tile(m, desired):
    """Largest lane tile <= desired that divides m (multiple of 128), else m."""
    if m <= desired:
        return m
    t = (desired // 128) * 128
    while t >= 128:
        if m % t == 0:
            return t
        t -= 128
    return m


# ----------------------------------------------------------------------------
# Kernel 1: per-voxel network forward (1x1x1 conv stack), NCM layout
#   x      : (N, 1, M)        in_channels = 1, M = H*W*D voxels
#   w1_aug : (Hid, 2)         [w1 | b1]  -- bias folded into the matmul
#   w2     : (C, Hid)
#   b2     : (C, 1)
#   out    : (N, C, M)        per-voxel class logits
# ----------------------------------------------------------------------------
def _net_fwd_kernel(x_ref, w1_ref, w2_ref, b2_ref, o_ref):
    x = x_ref[0].astype(jnp.float32)                       # (1, T)
    t = x.shape[1]
    # Build x_aug = [x; 1] without an unaligned sublane concat: broadcast +
    # row-select (a handful of VPU ops per vreg).
    row = jax.lax.broadcasted_iota(jnp.int32, (2, t), 0)
    x_aug = jnp.where(row == 0, x, jnp.float32(1.0))       # (2, T)
    # First layer (and its bias) on the MXU: (Hid, 2) @ (2, T).
    h = jnp.maximum(
        jnp.dot(w1_ref[...], x_aug, preferred_element_type=jnp.float32), 0.0)
    # Second layer on the MXU: (C, Hid) @ (Hid, T).
    logits = jnp.dot(w2_ref[...], h, preferred_element_type=jnp.float32)
    o_ref[0] = (logits + b2_ref[...]).astype(o_ref.dtype)


def net_forward_ncm(x3, w1_aug, w2, b2, *, tile=32768):
    """x3: (N, 1, M) f32 -> (N, C, M) f32 logits."""
    n, cin, m = x3.shape
    assert cin == 1
    c, hid = w2.shape
    t = _pick_tile(m, tile)
    grid = (n, m // t)
    return pl.pallas_call(
        _net_fwd_kernel,
        out_shape=jax.ShapeDtypeStruct((n, c, m), jnp.float32),
        grid=grid,
        in_specs=[
            pl.BlockSpec((1, 1, t), lambda ni, i: (ni, 0, i)),
            pl.BlockSpec((hid, 2), lambda ni, i: (0, 0)),
            pl.BlockSpec((c, hid), lambda ni, i: (0, 0)),
            pl.BlockSpec((c, 1), lambda ni, i: (0, 0)),
        ],
        out_specs=pl.BlockSpec((1, c, t), lambda ni, i: (ni, 0, i)),
        compiler_params=pltpu.CompilerParams(
            dimension_semantics=("parallel", "parallel")),
    )(x3, w1_aug, w2, b2)


# ----------------------------------------------------------------------------
# Kernel 2: SoftLoss partials, NCM layout
#   loss = -sum( softmax(lab, ch) * log_softmax(pred, ch) * (y == 0) )
#          / sum( y == 0 )
# Each grid point writes its own (num, den) partial into a lane-dense (8,128)
# output block -> fully parallel grid (both TCs on v7x), no serializing
# accumulator.  The tiny cross-tile reduce + divide happens in XLA.
# ----------------------------------------------------------------------------
def _soft_loss_kernel(pred_ref, lab_ref, y_ref, num_ref, den_ref):
    pred = pred_ref[0].astype(jnp.float32)                 # (C, T)
    lab = lab_ref[0].astype(jnp.float32)                   # (C, T)
    ty = (y_ref[0] == 0).astype(jnp.float32)               # (1, T)

    # softmax(lab) over channel axis; divide -> EUP approx reciprocal + mul.
    lab_m = jnp.max(lab, axis=0, keepdims=True)
    lab_e = jnp.exp(lab - lab_m)
    inv = pl.reciprocal(jnp.sum(lab_e, axis=0, keepdims=True), approx=True)
    p = lab_e * inv

    # log_softmax(pred) over channel axis.
    pred_m = jnp.max(pred, axis=0, keepdims=True)
    pred_s = pred - pred_m
    logq = pred_s - jnp.log(jnp.sum(jnp.exp(pred_s), axis=0, keepdims=True))

    num = jnp.sum(p * logq * ty)
    den = jnp.sum(ty)
    num_ref[...] = jnp.broadcast_to(num, num_ref.shape).astype(jnp.float32)
    den_ref[...] = jnp.broadcast_to(den, den_ref.shape).astype(jnp.float32)


def soft_loss_ncm(pred3, lab3, y3, *, tile=32768):
    """pred3, lab3: (N, C, M); y3: (N, 1, M) int -> scalar loss."""
    n, c, m = pred3.shape
    t = _pick_tile(m, tile)
    nt = m // t
    grid = (n, nt)
    num_p, den_p = pl.pallas_call(
        _soft_loss_kernel,
        out_shape=(
            jax.ShapeDtypeStruct((n, nt, 8, 128), jnp.float32),
            jax.ShapeDtypeStruct((n, nt, 8, 128), jnp.float32),
        ),
        grid=grid,
        in_specs=[
            pl.BlockSpec((1, c, t), lambda ni, i: (ni, 0, i)),
            pl.BlockSpec((1, c, t), lambda ni, i: (ni, 0, i)),
            pl.BlockSpec((1, 1, t), lambda ni, i: (ni, 0, i)),
        ],
        out_specs=(
            pl.BlockSpec((1, 1, 8, 128), lambda ni, i: (ni, i, 0, 0)),
            pl.BlockSpec((1, 1, 8, 128), lambda ni, i: (ni, i, 0, 0)),
        ),
        compiler_params=pltpu.CompilerParams(
            dimension_semantics=("parallel", "parallel")),
    )(pred3, lab3, y3)
    num = jnp.sum(num_p[:, :, 0, 0])
    den = jnp.sum(den_p[:, :, 0, 0])
    # NOTE: den == 0 (no y == 0 voxels) yields inf/nan, matching the PyTorch
    # reference's behavior.
    return -num / den


# ----------------------------------------------------------------------------
# CoTrainingModule equivalents (JAX glue around the kernels)
# ----------------------------------------------------------------------------
def init_params(key, num_classes, hidden=32):
    k1, k2, k3, k4 = jax.random.split(key, 4)

    def one_net(ka, kb):
        w1 = 0.1 * jax.random.normal(ka, (hidden, 1), jnp.float32)
        b1 = jnp.zeros((hidden, 1), jnp.float32)
        w2 = 0.1 * jax.random.normal(kb, (num_classes, hidden), jnp.float32)
        b2 = jnp.zeros((num_classes, 1), jnp.float32)
        return (w1, b1, w2, b2)

    return {"net1": one_net(k1, k2), "net2": one_net(k3, k4)}


def co_training_forward(x, params, net=1):
    """CoTrainingModule.forward: x (N, 1, H, W, D) -> logits (N, C, H, W, D)."""
    if net == 1:
        w1, b1, w2, b2 = params["net1"]
    elif net == 2:
        w1, b1, w2, b2 = params["net2"]
    else:
        raise ValueError("Invalid net id.")
    n, cin, h, w, d = x.shape
    assert cin == 1
    w1_aug = jnp.concatenate([w1, b1], axis=1)             # (Hid, 2), tiny
    out3 = net_forward_ncm(x.reshape(n, 1, h * w * d), w1_aug, w2, b2)
    return out3.reshape(n, w2.shape[0], h, w, d)


def soft_loss(pred_logits, lab_logits, y):
    """SoftLoss.forward: pred/lab (N, C, H, W, D), y (N, 1, H, W, D) int."""
    n, c, h, w, d = pred_logits.shape
    m = h * w * d
    return soft_loss_ncm(pred_logits.reshape(n, c, m),
                         lab_logits.reshape(n, c, m),
                         y.reshape(n, 1, m))


# ----------------------------------------------------------------------------
# Pure-JAX references for validation
# ----------------------------------------------------------------------------
def _ref_net(x, w1, b1, w2, b2):
    n, _, h, w_, d = x.shape
    x3 = x.reshape(n, 1, -1)
    hdn = jnp.maximum(jnp.einsum("oc,ncm->nom", w1, x3) + b1[None], 0.0)
    out = jnp.einsum("oc,ncm->nom", w2, hdn) + b2[None]
    return out.reshape(n, w2.shape[0], h, w_, d)


def _ref_soft_loss(pred, lab, y):
    ty = (y == 0).astype(jnp.float32)
    p = jax.nn.softmax(lab, axis=1)
    logq = jax.nn.log_softmax(pred, axis=1)
    return -jnp.sum(p * logq * ty) / jnp.sum(ty)


if __name__ == "__main__":
    num_classes = 4
    N, H, W, D = 2, 8, 8, 8

    key = jax.random.PRNGKey(0)
    kx, ky, kp = jax.random.split(key, 3)

    params = init_params(kp, num_classes)
    x = jax.random.normal(kx, (N, 1, H, W, D), jnp.float32)
    y = jax.random.randint(ky, (N, 1, H, W, D), 0, num_classes, jnp.int32)

    # forward through both nets (CoTrainingModule.forward)
    logits1 = co_training_forward(x, params, net=1)
    logits2 = co_training_forward(x, params, net=2)
    jax.block_until_ready((logits1, logits2))

    # SoftLoss kernel (dependent module)
    loss = soft_loss(logits1, logits2, y)
    jax.block_until_ready(loss)

    # validate against pure-JAX references
    ref1 = _ref_net(x, *params["net1"])
    ref2 = _ref_net(x, *params["net2"])
    ref_l = _ref_soft_loss(logits1, logits2, y)
    assert jnp.allclose(logits1, ref1, atol=1e-4, rtol=1e-4)
    assert jnp.allclose(logits2, ref2, atol=1e-4, rtol=1e-4)
    # approx-reciprocal softmax denominator -> slightly looser loss tolerance
    assert jnp.allclose(loss, ref_l, atol=5e-3, rtol=5e-3)

    print("KERNEL_OK")
</pallas_src>

<mosaic_0001>
module attributes {stable_mosaic.version = 11 : i64} {
  func.func @_net_fwd_kernel(%arg0: i32, %arg1: i32, %arg2: memref<1x1x512xf32, #tpu.memory_space<vmem>>, %arg3: memref<32x2xf32, #tpu.memory_space<vmem>>, %arg4: memref<4x32xf32, #tpu.memory_space<vmem>>, %arg5: memref<4x1xf32, #tpu.memory_space<vmem>>, %arg6: memref<1x4x512xf32, #tpu.memory_space<vmem>>) attributes {dimension_semantics = [#tpu.dimension_semantics<parallel>, #tpu.dimension_semantics<parallel>], iteration_bounds = array<i64: 2, 1>, scalar_prefetch = 0 : i64, scratch_operands = 0 : i64, tpu.core_type = #tpu.core_type<tc>, window_params = [{transform_indices = @transform_0, window_bounds = array<i64: 1, 1, 512>}, {pipeline_mode = #tpu.pipeline_mode<synchronous>, transform_indices = @transform_1, window_bounds = array<i64: 32, 2>}, {pipeline_mode = #tpu.pipeline_mode<synchronous>, transform_indices = @transform_2, window_bounds = array<i64: 4, 32>}, {pipeline_mode = #tpu.pipeline_mode<synchronous>, transform_indices = @transform_3, window_bounds = array<i64: 4, 1>}, {transform_indices = @transform_4, window_bounds = array<i64: 1, 4, 512>}]} {
    %c0 = arith.constant 0 : index
    %c0_0 = arith.constant 0 : index
    %c0_1 = arith.constant 0 : index
    %0 = vector.load %arg2[%c0, %c0_0, %c0_1] : memref<1x1x512xf32, #tpu.memory_space<vmem>>, vector<1x1x512xf32>
    %1 = vector.shape_cast %0 : vector<1x1x512xf32> to vector<1x512xf32>
    %2 = tpu.iota {dimensions = array<i32: 0>} : vector<2x512xi32>
    %c0_i32 = arith.constant 0 : i32
    %3 = vector.broadcast %c0_i32 : i32 to vector<2x512xi32>
    %4 = arith.cmpi eq, %2, %3 : vector<2x512xi32>
    %cst = arith.constant 1.000000e+00 : f32
    %5 = vector.shape_cast %1 : vector<1x512xf32> to vector<1x512xf32>
    %6 = vector.broadcast %5 : vector<1x512xf32> to vector<2x512xf32>
    %7 = vector.broadcast %cst : f32 to vector<2x512xf32>
    %8 = arith.select %4, %6, %7 : vector<2x512xi1>, vector<2x512xf32>
    %c0_2 = arith.constant 0 : index
    %c0_3 = arith.constant 0 : index
    %9 = vector.load %arg3[%c0_2, %c0_3] : memref<32x2xf32, #tpu.memory_space<vmem>>, vector<32x2xf32>
    %cst_4 = arith.constant dense<0.000000e+00> : vector<32x512xf32>
    %10 = tpu.matmul %9, %8, %cst_4 {dimension_numbers = #tpu.dot_dimension_numbers<[1], [0], [0], [1], [0, 0, 1, 1], [], []>} : vector<32x2xf32>, vector<2x512xf32>, vector<32x512xf32> -> vector<32x512xf32>
    %cst_5 = arith.constant 0.000000e+00 : f32
    %11 = vector.broadcast %cst_5 : f32 to vector<32x512xf32>
    %12 = arith.maximumf %10, %11 : vector<32x512xf32>
    %c0_6 = arith.constant 0 : index
    %c0_7 = arith.constant 0 : index
    %13 = vector.load %arg4[%c0_6, %c0_7] : memref<4x32xf32, #tpu.memory_space<vmem>>, vector<4x32xf32>
    %cst_8 = arith.constant dense<0.000000e+00> : vector<4x512xf32>
    %14 = tpu.matmul %13, %12, %cst_8 {dimension_numbers = #tpu.dot_dimension_numbers<[1], [0], [0], [1], [0, 0, 1, 1], [], []>} : vector<4x32xf32>, vector<32x512xf32>, vector<4x512xf32> -> vector<4x512xf32>
    %c0_9 = arith.constant 0 : index
    %c0_10 = arith.constant 0 : index
    %15 = vector.load %arg5[%c0_9, %c0_10] : memref<4x1xf32, #tpu.memory_space<vmem>>, vector<4x1xf32>
    %16 = vector.broadcast %15 : vector<4x1xf32> to vector<4x512xf32>
    %17 = arith.addf %14, %16 : vector<4x512xf32>
    %c0_11 = arith.constant 0 : index
    %c0_12 = arith.constant 0 : index
    %c0_13 = arith.constant 0 : index
    %18 = vector.load %arg6[%c0_11, %c0_12, %c0_13] : memref<1x4x512xf32, #tpu.memory_space<vmem>>, vector<1x4x512xf32>
    %19 = vector.shape_cast %18 : vector<1x4x512xf32> to vector<4x512xf32>
    %20 = vector.shape_cast %17 : vector<4x512xf32> to vector<1x4x512xf32>
    tpu.vector_store %arg6[%c0_11, %c0_12, %c0_13], %20 {strides = array<i32>} : memref<1x4x512xf32, #tpu.memory_space<vmem>>, vector<1x4x512xf32>,
    return
  }
  func.func @transform_0(%arg0: i32, %arg1: i32) -> (i32, i32, i32) {
    %c0_i32 = arith.constant 0 : i32
    %c0_i32_0 = arith.constant 0 : i32
    return %arg0, %c0_i32, %arg1 : i32, i32, i32
  }
  func.func @transform_1(%arg0: i32, %arg1: i32) -> (i32, i32) {
    %c0_i32 = arith.constant 0 : i32
    %c0_i32_0 = arith.constant 0 : i32
    %c0_i32_1 = arith.constant 0 : i32
    return %c0_i32, %c0_i32_0 : i32, i32
  }
  func.func @transform_2(%arg0: i32, %arg1: i32) -> (i32, i32) {
    %c0_i32 = arith.constant 0 : i32
    %c0_i32_0 = arith.constant 0 : i32
    %c0_i32_1 = arith.constant 0 : i32
    return %c0_i32, %c0_i32_0 : i32, i32
  }
  func.func @transform_3(%arg0: i32, %arg1: i32) -> (i32, i32) {
    %c0_i32 = arith.constant 0 : i32
    %c0_i32_0 = arith.constant 0 : i32
    %c0_i32_1 = arith.constant 0 : i32
    return %c0_i32, %c0_i32_0 : i32, i32
  }
  func.func @transform_4(%arg0: i32, %arg1: i32) -> (i32, i32, i32) {
    %c0_i32 = arith.constant 0 : i32
    %c0_i32_0 = arith.constant 0 : i32
    return %arg0, %c0_i32, %arg1 : i32, i32, i32
  }
}

</mosaic_0001>

<llo_original>
// kernel: tpu_custom_call.1
$region0: #{tpu_custom_call.1}
  #allocation0 [shape = 'u32[]', space=smem, size = 0x4, offset = 0x4, fixed_abs, tag = 'smem constant byte address 0x4 - core index']
  #allocation1 [shape = 'u32[144,128]{1,0:T(1,128)}', space=vmem, size = 0x12000, scoped, tag = 'internal scratch']
  %s0 = inlined_call_operand.vmem [shape: f32[2,1,512], index: 0, kind: input, shape index: {}]
  %s1 = inlined_call_operand.vmem [shape: f32[32,2], index: 1, kind: input, shape index: {}]
  %s2 = inlined_call_operand.vmem [shape: f32[4,32], index: 2, kind: input, shape index: {}]
  %s3 = inlined_call_operand.vmem [shape: f32[4,1], index: 3, kind: input, shape index: {}]
  %s4 = inlined_call_operand.hbm [shape: f32[2,4,512], index: 4, kind: output, shape index: {}]
  %s5 = sld [smem:[#allocation0]]
  $region49: #{tpu_custom_call.1} parent=0
    _
  %s7 = ssub.s32 1, %s5
  %s8 = scalar_select 0, %s7, %s5
  $region1: #{tpu_custom_call.1} parent=0
    #allocation2 [shape = 'u8[16384]{0}', space=vmem, size = 0x4000, scoped, tag = 'output window, operand 0']
    #allocation3 [shape = 's32[2]{0}', space=sflag, size = 0x8, scoped, tag = 'scoped memory for tpu_custom_call.1']
    %9 = vsyncpa [#allocation3], 0
    %s10 = scalar_lea.sflag [#allocation3], 1
    %11 = vsyncpa %s10, 0
    loop: start=0, step=1, limit=4
    $region2: #{tpu_custom_call.1} parent=1 // loop_pre_header
      _
    $region3: #{tpu_custom_call.1} parent=1 // loop_header
      %s13 = sphi 0, %s17
      %p14 = scmp.ge.s32.totalorder %s13, 4
      %s20 = sphi 0, %s32
      %s21 = sphi 0, %s28
      %s22 = sphi 0, %s20
      %s23 = sphi 0, %s21
      %s24 = sphi 0, %s22
      %s25 = sphi 0, %s23
      %s37 = sphi 0, %s39
      %s40 = sphi 0, %s37
      %s41 = sphi 0, %s40
      %s57 = sphi 0, %s41
      %s61 = sphi 0, %s61
      %s63 = sphi 0, %s61
      %s64 = sphi 0, %s63
      %s78 = sphi 0, %s64
      %s82 = sphi 0, %s82
      %s84 = sphi 0, %s82
      %s85 = sphi 0, %s84
      %s99 = sphi 0, %s85
      %s103 = sphi 0, %s103
      %s105 = sphi 0, %s103
      %s106 = sphi 0, %s105
      %s120 = sphi 0, %s106
      %s128 = sphi 0, %s130
      %s131 = sphi 0, %s128
      %s132 = sphi 0, %s131
      %s148 = sphi 0, %s132
    $region4: #{tpu_custom_call.1} parent=1 // loop_header_branch
      %16 = sbr.rel (%p14) target = $region8
    $region5: #{tpu_custom_call.1} parent=1 // loop_body
      %s18 = ssub.s32 %s13, 1
      %s19 = ssub.s32 %s13, 2
      %s26 = sadd.s32 1, %s21
      %p27 = scmp.ge.s32.totalorder %s26, 1
      %s28 = scalar_select %p27, 0, %s26
      %s29 = sadd.s32 1, %s20
      %s30 = scalar_select %p27, %s29, %s20
      %p31 = scmp.ge.s32.totalorder %s30, 2
      %s32 = scalar_select %p31, 0, %s30
      %s33 = ssub.s32 %s20, %s32
      %s34 = ssub.s32 %s21, %s28
      %s35 = sor.u32 %s33, %s34
      %p36 = scmp.eq.s32.totalorder %s35, 0
      %s38 = sadd.s32 %s37, 1
      %s39 = scalar_select %p36, %s37, %s38
      %p42 = pneg %p36
      %p43 = scmp.eq.s32.totalorder %s13, 1
      %p44 = por %p42, %p43
      %p45 = scmp.ne.s32.totalorder %s37, %s40
      %p46 = scmp.eq.s32.totalorder %s13, 0
      %p47 = por %p45, %p46
      %p48 = scmp.ne.s32.totalorder %s37, %s40
      %p49 = scmp.eq.s32.totalorder %s18, 1
      %p50 = por %p48, %p49
      %p51 = scmp.ne.s32.totalorder %s40, %s41
      %p52 = scmp.eq.s32.totalorder %s18, 0
      %p53 = por %p51, %p52
      %p54 = scmp.ne.s32.totalorder %s40, %s41
      %p55 = scmp.eq.s32.totalorder %s19, 1
      %p56 = por %p54, %p55
      %p58 = scmp.ne.s32.totalorder %s41, %s57
      %p59 = scmp.eq.s32.totalorder %s19, 0
      %p60 = por %p58, %p59
      %s62 = sadd.s32 %s61, 1
      %p65 = scmp.eq.s32.totalorder %s13, 1
      %p66 = scmp.ne.s32.totalorder %s61, %s63
      %p67 = scmp.eq.s32.totalorder %s13, 0
      %p68 = por %p66, %p67
      %p69 = scmp.ne.s32.totalorder %s61, %s63
      %p70 = scmp.eq.s32.totalorder %s18, 1
      %p71 = por %p69, %p70
      %p72 = scmp.ne.s32.totalorder %s63, %s64
      %p73 = scmp.eq.s32.totalorder %s18, 0
      %p74 = por %p72, %p73
      %p75 = scmp.ne.s32.totalorder %s63, %s64
      %p76 = scmp.eq.s32.totalorder %s19, 1
      %p77 = por %p75, %p76
      %p79 = scmp.ne.s32.totalorder %s64, %s78
      %p80 = scmp.eq.s32.totalorder %s19, 0
      %p81 = por %p79, %p80
      %s83 = sadd.s32 %s82, 1
      %p86 = scmp.eq.s32.totalorder %s13, 1
      %p87 = scmp.ne.s32.totalorder %s82, %s84
      %p88 = scmp.eq.s32.totalorder %s13, 0
      %p89 = por %p87, %p88
      %p90 = scmp.ne.s32.totalorder %s82, %s84
      %p91 = scmp.eq.s32.totalorder %s18, 1
      %p92 = por %p90, %p91
      %p93 = scmp.ne.s32.totalorder %s84, %s85
      %p94 = scmp.eq.s32.totalorder %s18, 0
      %p95 = por %p93, %p94
      %p96 = scmp.ne.s32.totalorder %s84, %s85
      %p97 = scmp.eq.s32.totalorder %s19, 1
      %p98 = por %p96, %p97
      %p100 = scmp.ne.s32.totalorder %s85, %s99
      %p101 = scmp.eq.s32.totalorder %s19, 0
      %p102 = por %p100, %p101
      %s104 = sadd.s32 %s103, 1
      %p107 = scmp.eq.s32.totalorder %s13, 1
      %p108 = scmp.ne.s32.totalorder %s103, %s105
      %p109 = scmp.eq.s32.totalorder %s13, 0
      %p110 = por %p108, %p109
      %p111 = scmp.ne.s32.totalorder %s103, %s105
      %p112 = scmp.eq.s32.totalorder %s18, 1
      %p113 = por %p111, %p112
      %p114 = scmp.ne.s32.totalorder %s105, %s106
      %p115 = scmp.eq.s32.totalorder %s18, 0
      %p116 = por %p114, %p115
      %p117 = scmp.ne.s32.totalorder %s105, %s106
      %p118 = scmp.eq.s32.totalorder %s19, 1
      %p119 = por %p117, %p118
      %p121 = scmp.ne.s32.totalorder %s106, %s120
      %p122 = scmp.eq.s32.totalorder %s19, 0
      %p123 = por %p121, %p122
      %s124 = ssub.s32 %s20, %s32
      %s125 = ssub.s32 %s21, %s28
      %s126 = sor.u32 %s124, %s125
      %p127 = scmp.eq.s32.totalorder %s126, 0
      %s129 = sadd.s32 %s128, 1
      %s130 = scalar_select %p127, %s128, %s129
      %p133 = pneg %p127
      %p134 = scmp.eq.s32.totalorder %s13, 1
      %p135 = por %p133, %p134
      %p136 = scmp.ne.s32.totalorder %s128, %s131
      %p137 = scmp.eq.s32.totalorder %s13, 0
      %p138 = por %p136, %p137
      %p139 = scmp.ne.s32.totalorder %s128, %s131
      %p140 = scmp.eq.s32.totalorder %s18, 1
      %p141 = por %p139, %p140
      %p142 = scmp.ne.s32.totalorder %s131, %s132
      %p143 = scmp.eq.s32.totalorder %s18, 0
      %p144 = por %p142, %p143
      %p145 = scmp.ne.s32.totalorder %s131, %s132
      %p146 = scmp.eq.s32.totalorder %s19, 1
      %p147 = por %p145, %p146
      %p149 = scmp.ne.s32.totalorder %s132, %s148
      %p150 = scmp.eq.s32.totalorder %s19, 0
      %p151 = por %p149, %p150
      %p152 = scmp.le.s32.totalorder 1, %s13
      %p153 = scmp.lt.s32.totalorder %s13, 3
      %p154 = pnand %p152, %p153
      %p155 = pneg %p154
      // Predicated region
      $region9: #{tpu_custom_call.1} parent=5 // pred_check
        _
      $region10: #{tpu_custom_call.1} parent=5 // pred_check_branch
        %157 = sbr.rel (%p154) target = $region12
      $region11: #{tpu_custom_call.1} parent=5 // pred_region
        %s158 = ssub.s32 %s13, 1
        // Predicated region
        $region13: #{tpu_custom_call.1} parent=11 // pred_check
          %p159 = pneg %p74
        $region14: #{tpu_custom_call.1} parent=11 // pred_check_branch
          %161 = sbr.rel (%p159) target = $region16
        $region15: #{tpu_custom_call.1} parent=11 // pred_region
          _
        $region16: #{tpu_custom_call.1} parent=11 // pred_fallthru
          _
        // Predicated region
        $region17: #{tpu_custom_call.1} parent=11 // pred_check
          %p162 = pneg %p95
        $region18: #{tpu_custom_call.1} parent=11 // pred_check_branch
          %164 = sbr.rel (%p162) target = $region20
        $region19: #{tpu_custom_call.1} parent=11 // pred_region
          _
        $region20: #{tpu_custom_call.1} parent=11 // pred_fallthru
          _
        // Predicated region
        $region21: #{tpu_custom_call.1} parent=11 // pred_check
          %p165 = pneg %p116
        $region22: #{tpu_custom_call.1} parent=11 // pred_check_branch
          %167 = sbr.rel (%p165) target = $region24
        $region23: #{tpu_custom_call.1} parent=11 // pred_region
          _
        $region24: #{tpu_custom_call.1} parent=11 // pred_fallthru
          _
      $region12: #{tpu_custom_call.1} parent=5 // pred_fallthru
        _
      %p168 = scmp.lt.s32.totalorder %s13, 2
      // Predicated region
      $region25: #{tpu_custom_call.1} parent=5 // pred_check
        %p169 = pneg %p168
      $region26: #{tpu_custom_call.1} parent=5 // pred_check_branch
        %171 = sbr.rel (%p169) target = $region28
      $region27: #{tpu_custom_call.1} parent=5 // pred_region
        // Predicated region
        $region29: #{tpu_custom_call.1} parent=27 // pred_check
          %p172 = pneg %p47
        $region30: #{tpu_custom_call.1} parent=27 // pred_check_branch
          %174 = sbr.rel (%p172) target = $region32
        $region31: #{tpu_custom_call.1} parent=27 // pred_region
          %s175 = smul.u32 4, %s21
          %p176 = scmp.lt.s32.totalorder %s20, 1
          %s177 = scalar_select %p176, %s20, 1
          %p178 = scmp.lt.s32.totalorder %s175, 3
          %s179 = scalar_select %p178, %s175, 3
          %s180 = smul.addr %s177, 4
          %s181 = sadd.s32 %s179, %s180
          %s182 = scalar_lea.vmem %s0, %s181
          %s183 = smul.u32 4, %s21
        $region32: #{tpu_custom_call.1} parent=27 // pred_fallthru
          _
      $region28: #{tpu_custom_call.1} parent=5 // pred_fallthru
        _
      %p184 = scmp.le.s32.totalorder 1, %s13
      %p185 = scmp.lt.s32.totalorder %s13, 3
      %p186 = pnand %p184, %p185
      %p187 = pneg %p186
      // Predicated region
      $region33: #{tpu_custom_call.1} parent=5 // pred_check
        _
      $region34: #{tpu_custom_call.1} parent=5 // pred_check_branch
        %189 = sbr.rel (%p186) target = $region36
      $region35: #{tpu_custom_call.1} parent=5 // pred_region
        %s190 = ssub.s32 %s13, 1
        %s191 = smul.u32 4, %s23
        %p192 = scmp.lt.s32.totalorder %s22, 1
        %s193 = scalar_select %p192, %s22, 1
        %p194 = scmp.lt.s32.totalorder %s191, 3
        %s195 = scalar_select %p194, %s191, 3
        %s196 = smul.addr %s193, 4
        %s197 = sadd.s32 %s195, %s196
        %s198 = scalar_lea.vmem %s0, %s197
        %p199 = pneg %p53
        %p200 = pneg %p50
        %p201 = pneg %p74
        %p202 = pneg %p71
        %p203 = pneg %p95
        %p204 = pneg %p92
        %p205 = pneg %p116
        %p206 = pneg %p113
        %p207 = pneg %p144
        %p208 = pneg %p141
        %s209 = sand.u32 %s131, 1
        %s210 = scalar_lea.sflag [#allocation3], %s209
        %s211 = sand.u32 %s131, 1
        %s212 = smul.addr %s211, 16
        %s213 = scalar_lea.vmem [#allocation2], %s212
        %s214 = smul.u32 4, %s23
        %p215 = scmp.lt.s32.totalorder %s22, 1
        %s216 = scalar_select %p215, %s22, 1
        %p217 = scmp.lt.s32.totalorder %s214, 3
        %s218 = scalar_select %p217, %s214, 3
        %s219 = smul.addr %s216, 4
        %s220 = sadd.s32 %s218, %s219
        %s221 = scalar_lea.vmem %s0, %s220
        %s222 = smul.u32 4, %s23
        %s223 = smul.u32 4, %s23
        %v224 = vld [vmem:[%s221] sm:$0xf]
        %v225 = vlaneseq
        %v226 = vshrl.u32 %v225, 7
        %vm227 = vcmp.eq.s32.totalorder %v226, 0
        %v229 = vlaneseq
        %v230 = vshrl.u32 %v229, 7
        %v231 = vsub.s32 0, %v230
        %v232 = vrot.slane %v224, %v231
        %v233 = vlaneseq
        %v234 = vshrl.u32 %v233, 7
        %v235 = vsub.s32 1, %v234
        %v236 = vrot.slane %v224, %v235
        %v237 = vlaneseq
        %v238 = vshrl.u32 %v237, 7
        %v239 = vsub.s32 2, %v238
        %v240 = vrot.slane %v224, %v239
        %v241 = vlaneseq
        %v242 = vshrl.u32 %v241, 7
        %v243 = vsub.s32 3, %v242
        %v244 = vrot.slane %v224, %v243
        %v249 = vsel %vm227, %v232, 1.0
        %v250 = vsel %vm227, %v236, 1.0
        %v251 = vsel %vm227, %v240, 1.0
        %v252 = vsel %vm227, %v244, 1.0
        %v253 = vld [vmem:[%s1] sm:$0xff]
        %v254 = vld [vmem:[%s1 + $0x8] sm:$0xff]
        %v255 = vld [vmem:[%s1 + $0x10] sm:$0xff]
        %v256 = vld [vmem:[%s1 + $0x18] sm:$0xff]
        %vm257 = vcmask 15360
        %v259 = vsel %vm257, %v253, 0
        %v262 = vsel %vm257, %v254, 0
        %v265 = vsel %vm257, %v255, 0
        %v268 = vsel %vm257, %v256, 0
        %vm270 = vcmask 1041408
        %v272 = vsel %vm270, %v249, 0
        %v275 = vsel %vm270, %v250, 0
        %v278 = vsel %vm270, %v251, 0
        %v281 = vsel %vm270, %v252, 0
        %283 = vmatprep.subr.mxu0 %v275
        %284 = vmatpush1.msra.mxu0 %v272
        %285 = vmatprep.subr.mxu0 0.0
        %286 = vmatpush1.msra.mxu0 0.0
        %287 = vmatprep.subr.mxu0 0.0
        %288 = vmatpush1.msra.mxu0 0.0
        %289 = vmatprep.subr.mxu0 0.0
        %290 = vmatpush1.msra.mxu0 0.0
        %291 = vmatprep.subr.mxu0 0.0
        %292 = vmatpush1.msra.mxu0 0.0
        %293 = vmatprep.subr.mxu0 0.0
        %294 = vmatpush1.msra.mxu0 0.0
        %295 = vmatprep.subr.mxu0 0.0
        %296 = vmatpush1.msra.mxu0 0.0
        %297 = vmatprep.subr.mxu0 0.0
        %298 = vmatpush1.msra.mxu0 0.0
        %299 = vmatprep.subr.mxu0 0.0
        %300 = vmatpush1.msra.mxu0 0.0
        %301 = vmatprep.subr.mxu0 0.0
        %302 = vmatpush1.msra.mxu0 0.0
        %303 = vmatprep.subr.mxu0 0.0
        %304 = vmatpush1.msra.mxu0 0.0
        %305 = vmatprep.subr.mxu0 0.0
        %306 = vmatpush1.msra.mxu0 0.0
        %307 = vmatprep.subr.mxu0 0.0
        %308 = vmatpush1.msra.mxu0 0.0
        %309 = vmatprep.subr.mxu0 0.0
        %310 = vmatpush1.msra.mxu0 0.0
        %311 = vmatprep.subr.mxu0 0.0
        %312 = vmatpush1.msra.mxu0 0.0
        %313 = vmatprep.subr.mxu0 0.0
        %314 = vmatpush1.msra.mxu0 0.0
        %315 = vmatprep.subr.mxu0 0.0
        %316 = vmatpush1.msra.mxu0 0.0
        %317 = vmatprep.subr.mxu0 0.0
        %318 = vmatpush1.msra.mxu0 0.0
        %319 = vmatprep.subr.mxu0 0.0
        %320 = vmatpush1.msra.mxu0 0.0
        %321 = vmatprep.subr.mxu0 0.0
        %322 = vmatpush1.msra.mxu0 0.0
        %323 = vmatprep.subr.mxu0 0.0
        %324 = vmatpush1.msra.mxu0 0.0
        %325 = vmatprep.subr.mxu0 0.0
        %326 = vmatpush1.msra.mxu0 0.0
        %327 = vmatprep.subr.mxu0 0.0
        %328 = vmatpush1.msra.mxu0 0.0
        %329 = vmatprep.subr.mxu0 0.0
        %330 = vmatpush1.msra.mxu0 0.0
        %331 = vmatprep.subr.mxu0 0.0
        %332 = vmatpush1.msra.mxu0 0.0
        %333 = vmatprep.subr.mxu0 0.0
        %334 = vmatpush1.msra.mxu0 0.0
        %335 = vmatprep.subr.mxu0 0.0
        %336 = vmatpush1.msra.mxu0 0.0
        %337 = vmatprep.subr.mxu0 0.0
        %338 = vmatpush1.msra.mxu0 0.0
        %339 = vmatprep.subr.mxu0 0.0
        %340 = vmatpush1.msra.mxu0 0.0
        %341 = vmatprep.subr.mxu0 0.0
        %342 = vmatpush1.msra.mxu0 0.0
        %343 = vmatprep.subr.mxu0 0.0
        %344 = vmatpush1.msra.mxu0 0.0
        %345 = vmatprep.subr.mxu0 0.0
        %346 = vmatpush1.msra.mxu0 0.0
        %347 = vmatprep.mubr.f32.mxu0 0.0
        %348 = vmatmul.mubr.f32.gmra.mrb[0].mxu0 %v259
        %v349 = vpop.f32.mrb[0].mxu0
        %v350 = vadd.f32 0.0, %v349
        %v351 = vpop.f32.mrb[0].mxu0
        %v352 = vadd.f32 0.0, %v351
        %353 = vmatprep.mubr.f32.mxu0 0.0
        %354 = vmatmul.mubr.f32.gmra.mrb[0].mxu0 %v262
        %v355 = vpop.f32.mrb[0].mxu0
        %v356 = vadd.f32 0.0, %v355
        %v357 = vpop.f32.mrb[0].mxu0
        %v358 = vadd.f32 0.0, %v357
        %359 = vmatprep.mubr.f32.mxu0 0.0
        %360 = vmatmul.mubr.f32.gmra.mrb[0].mxu0 %v265
        %v361 = vpop.f32.mrb[0].mxu0
        %v362 = vadd.f32 0.0, %v361
        %v363 = vpop.f32.mrb[0].mxu0
        %v364 = vadd.f32 0.0, %v363
        %365 = vmatprep.mubr.f32.mxu0 0.0
        %366 = vmatmul.mubr.f32.gmra.mrb[0].mxu0 %v268
        %v367 = vpop.f32.mrb[0].mxu0
        %v368 = vadd.f32 0.0, %v367
        %v369 = vpop.f32.mrb[0].mxu0
        %v370 = vadd.f32 0.0, %v369
        %371 = vdwg.mxu0
        %372 = vmatprep.subr.mxu0 %v281
        %373 = vmatpush1.msra.mxu0 %v278
        %374 = vmatprep.subr.mxu0 0.0
        %375 = vmatpush1.msra.mxu0 0.0
        %376 = vmatprep.subr.mxu0 0.0
        %377 = vmatpush1.msra.mxu0 0.0
        %378 = vmatprep.subr.mxu0 0.0
        %379 = vmatpush1.msra.mxu0 0.0
        %380 = vmatprep.subr.mxu0 0.0
        %381 = vmatpush1.msra.mxu0 0.0
        %382 = vmatprep.subr.mxu0 0.0
        %383 = vmatpush1.msra.mxu0 0.0
        %384 = vmatprep.subr.mxu0 0.0
        %385 = vmatpush1.msra.mxu0 0.0
        %386 = vmatprep.subr.mxu0 0.0
        %387 = vmatpush1.msra.mxu0 0.0
        %388 = vmatprep.subr.mxu0 0.0
        %389 = vmatpush1.msra.mxu0 0.0
        %390 = vmatprep.subr.mxu0 0.0
        %391 = vmatpush1.msra.mxu0 0.0
        %392 = vmatprep.subr.mxu0 0.0
        %393 = vmatpush1.msra.mxu0 0.0
        %394 = vmatprep.subr.mxu0 0.0
        %395 = vmatpush1.msra.mxu0 0.0
        %396 = vmatprep.subr.mxu0 0.0
        %397 = vmatpush1.msra.mxu0 0.0
        %398 = vmatprep.subr.mxu0 0.0
        %399 = vmatpush1.msra.mxu0 0.0
        %400 = vmatprep.subr.mxu0 0.0
        %401 = vmatpush1.msra.mxu0 0.0
        %402 = vmatprep.subr.mxu0 0.0
        %403 = vmatpush1.msra.mxu0 0.0
        %404 = vmatprep.subr.mxu0 0.0
        %405 = vmatpush1.msra.mxu0 0.0
        %406 = vmatprep.subr.mxu0 0.0
        %407 = vmatpush1.msra.mxu0 0.0
        %408 = vmatprep.subr.mxu0 0.0
        %409 = vmatpush1.msra.mxu0 0.0
        %410 = vmatprep.subr.mxu0 0.0
        %411 = vmatpush1.msra.mxu0 0.0
        %412 = vmatprep.subr.mxu0 0.0
        %413 = vmatpush1.msra.mxu0 0.0
        %414 = vmatprep.subr.mxu0 0.0
        %415 = vmatpush1.msra.mxu0 0.0
        %416 = vmatprep.subr.mxu0 0.0
        %417 = vmatpush1.msra.mxu0 0.0
        %418 = vmatprep.subr.mxu0 0.0
        %419 = vmatpush1.msra.mxu0 0.0
        %420 = vmatprep.subr.mxu0 0.0
        %421 = vmatpush1.msra.mxu0 0.0
        %422 = vmatprep.subr.mxu0 0.0
        %423 = vmatpush1.msra.mxu0 0.0
        %424 = vmatprep.subr.mxu0 0.0
        %425 = vmatpush1.msra.mxu0 0.0
        %426 = vmatprep.subr.mxu0 0.0
        %427 = vmatpush1.msra.mxu0 0.0
        %428 = vmatprep.subr.mxu0 0.0
        %429 = vmatpush1.msra.mxu0 0.0
        %430 = vmatprep.subr.mxu0 0.0
        %431 = vmatpush1.msra.mxu0 0.0
        %432 = vmatprep.subr.mxu0 0.0
        %433 = vmatpush1.msra.mxu0 0.0
        %434 = vmatprep.subr.mxu0 0.0
        %435 = vmatpush1.msra.mxu0 0.0
        %436 = vmatprep.mubr.f32.mxu0 0.0
        %437 = vmatmul.mubr.f32.gmra.mrb[0].mxu0 %v259
        %v438 = vpop.f32.mrb[0].mxu0
        %v439 = vadd.f32 0.0, %v438
        %v440 = vpop.f32.mrb[0].mxu0
        %v441 = vadd.f32 0.0, %v440
        %442 = vmatprep.mubr.f32.mxu0 0.0
        %443 = vmatmul.mubr.f32.gmra.mrb[0].mxu0 %v262
        %v444 = vpop.f32.mrb[0].mxu0
        %v445 = vadd.f32 0.0, %v444
        %v446 = vpop.f32.mrb[0].mxu0
        %v447 = vadd.f32 0.0, %v446
        %448 = vmatprep.mubr.f32.mxu0 0.0
        %449 = vmatmul.mubr.f32.gmra.mrb[0].mxu0 %v265
        %v450 = vpop.f32.mrb[0].mxu0
        %v451 = vadd.f32 0.0, %v450
        %v452 = vpop.f32.mrb[0].mxu0
        %v453 = vadd.f32 0.0, %v452
        %454 = vmatprep.mubr.f32.mxu0 0.0
        %455 = vmatmul.mubr.f32.gmra.mrb[0].mxu0 %v268
        %v456 = vpop.f32.mrb[0].mxu0
        %v457 = vadd.f32 0.0, %v456
        %v458 = vpop.f32.mrb[0].mxu0
        %v459 = vadd.f32 0.0, %v458
        %460 = vdwg.mxu0
        %v461 = vmax.f32 %v350, 0.0
        %v462 = vmax.f32 %v352, 0.0
        %v463 = vmax.f32 %v439, 0.0
        %v464 = vmax.f32 %v441, 0.0
        %v465 = vmax.f32 %v356, 0.0
        %v466 = vmax.f32 %v358, 0.0
        %v467 = vmax.f32 %v445, 0.0
        %v468 = vmax.f32 %v447, 0.0
        %v469 = vmax.f32 %v362, 0.0
        %v470 = vmax.f32 %v364, 0.0
        %v471 = vmax.f32 %v451, 0.0
        %v472 = vmax.f32 %v453, 0.0
        %v473 = vmax.f32 %v368, 0.0
        %v474 = vmax.f32 %v370, 0.0
        %v475 = vmax.f32 %v457, 0.0
        %v476 = vmax.f32 %v459, 0.0
        %v477 = vld [vmem:[%s2] sm:$0xf]
        %v478 = vld [vmem:[%s3] sm:$0xf]
        %480 = vset.pattern.permute.xlu0 0
        %481 = vperm.xlu0 %480, %v478
        %v482 = vpop.permute.xlu0 %481
        %vm484 = vcmask 261120
        %v486 = vsel %vm484, %v477, 0
        %488 = vmatprep.subr.mxu0 %v462
        %489 = vmatpush1.msra.mxu0 %v461
        %490 = vmatprep.subr.mxu0 %v466
        %491 = vmatpush1.msra.mxu0 %v465
        %492 = vmatprep.subr.mxu0 %v470
        %493 = vmatpush1.msra.mxu0 %v469
        %494 = vmatprep.subr.mxu0 %v474
        %495 = vmatpush1.msra.mxu0 %v473
        %496 = vmatprep.subr.mxu0 0.0
        %497 = vmatpush1.msra.mxu0 0.0
        %498 = vmatprep.subr.mxu0 0.0
        %499 = vmatpush1.msra.mxu0 0.0
        %500 = vmatprep.subr.mxu0 0.0
        %501 = vmatpush1.msra.mxu0 0.0
        %502 = vmatprep.subr.mxu0 0.0
        %503 = vmatpush1.msra.mxu0 0.0
        %504 = vmatprep.subr.mxu0 0.0
        %505 = vmatpush1.msra.mxu0 0.0
        %506 = vmatprep.subr.mxu0 0.0
        %507 = vmatpush1.msra.mxu0 0.0
        %508 = vmatprep.subr.mxu0 0.0
        %509 = vmatpush1.msra.mxu0 0.0
        %510 = vmatprep.subr.mxu0 0.0
        %511 = vmatpush1.msra.mxu0 0.0
        %512 = vmatprep.subr.mxu0 0.0
        %513 = vmatpush1.msra.mxu0 0.0
        %514 = vmatprep.subr.mxu0 0.0
        %515 = vmatpush1.msra.mxu0 0.0
        %516 = vmatprep.subr.mxu0 0.0
        %517 = vmatpush1.msra.mxu0 0.0
        %518 = vmatprep.subr.mxu0 0.0
        %519 = vmatpush1.msra.mxu0 0.0
        %520 = vmatprep.subr.mxu0 0.0
        %521 = vmatpush1.msra.mxu0 0.0
        %522 = vmatprep.subr.mxu0 0.0
        %523 = vmatpush1.msra.mxu0 0.0
        %524 = vmatprep.subr.mxu0 0.0
        %525 = vmatpush1.msra.mxu0 0.0
        %526 = vmatprep.subr.mxu0 0.0
        %527 = vmatpush1.msra.mxu0 0.0
        %528 = vmatprep.subr.mxu0 0.0
        %529 = vmatpush1.msra.mxu0 0.0
        %530 = vmatprep.subr.mxu0 0.0
        %531 = vmatpush1.msra.mxu0 0.0
        %532 = vmatprep.subr.mxu0 0.0
        %533 = vmatpush1.msra.mxu0 0.0
        %534 = vmatprep.subr.mxu0 0.0
        %535 = vmatpush1.msra.mxu0 0.0
        %536 = vmatprep.subr.mxu0 0.0
        %537 = vmatpush1.msra.mxu0 0.0
        %538 = vmatprep.subr.mxu0 0.0
        %539 = vmatpush1.msra.mxu0 0.0
        %540 = vmatprep.subr.mxu0 0.0
        %541 = vmatpush1.msra.mxu0 0.0
        %542 = vmatprep.subr.mxu0 0.0
        %543 = vmatpush1.msra.mxu0 0.0
        %544 = vmatprep.subr.mxu0 0.0
        %545 = vmatpush1.msra.mxu0 0.0
        %546 = vmatprep.subr.mxu0 0.0
        %547 = vmatpush1.msra.mxu0 0.0
        %548 = vmatprep.subr.mxu0 0.0
        %549 = vmatpush1.msra.mxu0 0.0
        %550 = vmatprep.subr.mxu0 0.0
        %551 = vmatpush1.msra.mxu0 0.0
        %552 = vmatprep.mubr.f32.mxu0 0.0
        %553 = vmatmul.mubr.f32.gmra.mrb[0].mxu0 %v486
        %v554 = vpop.f32.mrb[0].mxu0
        %v555 = vadd.f32 %v482, %v554
        %v556 = vpop.f32.mrb[0].mxu0
        %v557 = vadd.f32 %v482, %v556
        %558 = vdwg.mxu0
        %559 = vmatprep.subr.mxu0 %v464
        %560 = vmatpush1.msra.mxu0 %v463
        %561 = vmatprep.subr.mxu0 %v468
        %562 = vmatpush1.msra.mxu0 %v467
        %563 = vmatprep.subr.mxu0 %v472
        %564 = vmatpush1.msra.mxu0 %v471
        %565 = vmatprep.subr.mxu0 %v476
        %566 = vmatpush1.msra.mxu0 %v475
        %567 = vmatprep.subr.mxu0 0.0
        %568 = vmatpush1.msra.mxu0 0.0
        %569 = vmatprep.subr.mxu0 0.0
        %570 = vmatpush1.msra.mxu0 0.0
        %571 = vmatprep.subr.mxu0 0.0
        %572 = vmatpush1.msra.mxu0 0.0
        %573 = vmatprep.subr.mxu0 0.0
        %574 = vmatpush1.msra.mxu0 0.0
        %575 = vmatprep.subr.mxu0 0.0
        %576 = vmatpush1.msra.mxu0 0.0
        %577 = vmatprep.subr.mxu0 0.0
        %578 = vmatpush1.msra.mxu0 0.0
        %579 = vmatprep.subr.mxu0 0.0
        %580 = vmatpush1.msra.mxu0 0.0
        %581 = vmatprep.subr.mxu0 0.0
        %582 = vmatpush1.msra.mxu0 0.0
        %583 = vmatprep.subr.mxu0 0.0
        %584 = vmatpush1.msra.mxu0 0.0
        %585 = vmatprep.subr.mxu0 0.0
        %586 = vmatpush1.msra.mxu0 0.0
        %587 = vmatprep.subr.mxu0 0.0
        %588 = vmatpush1.msra.mxu0 0.0
        %589 = vmatprep.subr.mxu0 0.0
        %590 = vmatpush1.msra.mxu0 0.0
        %591 = vmatprep.subr.mxu0 0.0
        %592 = vmatpush1.msra.mxu0 0.0
        %593 = vmatprep.subr.mxu0 0.0
        %594 = vmatpush1.msra.mxu0 0.0
        %595 = vmatprep.subr.mxu0 0.0
        %596 = vmatpush1.msra.mxu0 0.0
        %597 = vmatprep.subr.mxu0 0.0
        %598 = vmatpush1.msra.mxu0 0.0
        %599 = vmatprep.subr.mxu0 0.0
        %600 = vmatpush1.msra.mxu0 0.0
        %601 = vmatprep.subr.mxu0 0.0
        %602 = vmatpush1.msra.mxu0 0.0
        %603 = vmatprep.subr.mxu0 0.0
        %604 = vmatpush1.msra.mxu0 0.0
        %605 = vmatprep.subr.mxu0 0.0
        %606 = vmatpush1.msra.mxu0 0.0
        %607 = vmatprep.subr.mxu0 0.0
        %608 = vmatpush1.msra.mxu0 0.0
        %609 = vmatprep.subr.mxu0 0.0
        %610 = vmatpush1.msra.mxu0 0.0
        %611 = vmatprep.subr.mxu0 0.0
        %612 = vmatpush1.msra.mxu0 0.0
        %613 = vmatprep.subr.mxu0 0.0
        %614 = vmatpush1.msra.mxu0 0.0
        %615 = vmatprep.subr.mxu0 0.0
        %616 = vmatpush1.msra.mxu0 0.0
        %617 = vmatprep.subr.mxu0 0.0
        %618 = vmatpush1.msra.mxu0 0.0
        %619 = vmatprep.subr.mxu0 0.0
        %620 = vmatpush1.msra.mxu0 0.0
        %621 = vmatprep.subr.mxu0 0.0
        %622 = vmatpush1.msra.mxu0 0.0
        %623 = vmatprep.mubr.f32.mxu0 0.0
        %624 = vmatmul.mubr.f32.gmra.mrb[0].mxu0 %v486
        %v625 = vpop.f32.mrb[0].mxu0
        %v626 = vadd.f32 %v482, %v625
        %v627 = vpop.f32.mrb[0].mxu0
        %v628 = vadd.f32 %v482, %v627
        %629 = vdwg.mxu0
        %v634 = vcombine.low %v555, %v557
        %v635 = vcombine.low %v626, %v628
        %638 = vst [vmem:[%s213] sm:$0xff] %v634
        %639 = vst [vmem:[%s213 + $0x8] sm:$0xff] %v635
        %s640 = sand.u32 %s131, 1
        %s641 = scalar_lea.sflag [#allocation3], %s640
        %s642 = sand.u32 %s131, 1
        %s643 = smul.addr %s642, 16
        %s644 = scalar_lea.vmem [#allocation2], %s643
        // Predicated region
        $region37: #{tpu_custom_call.1} parent=35 // pred_check
          %p645 = pneg %p141
        $region38: #{tpu_custom_call.1} parent=35 // pred_check_branch
          %647 = sbr.rel (%p645) target = $region40
        $region39: #{tpu_custom_call.1} parent=35 // pred_region
          %s648 = smul.u32 4, %s23
          %s650 = ssub.s32 256, 256
          %651 = vsyncadd %s641, %s650
          %s652 = smul.addr %s22, 4
          %s653 = sadd.s32 %s648, %s652
          %s654 = smul.addr %s653, 64
          %s655 = scalar_lea.hbm %s4, %s654
          %s657 = sshll.u32 %s644, 4
          %s658 = int_to_ptr.vmem [resolvable:$true] %s657
          %660 = dma.vmem_to_hbm [thread:$0]  %s658, 256, %s655, %s641
        $region40: #{tpu_custom_call.1} parent=35 // pred_fallthru
          _
      $region36: #{tpu_custom_call.1} parent=5 // pred_fallthru
        _
      %p661 = scmp.le.s32.totalorder 2, %s13
      // Predicated region
      $region41: #{tpu_custom_call.1} parent=5 // pred_check
        %p662 = pneg %p661
      $region42: #{tpu_custom_call.1} parent=5 // pred_check_branch
        %664 = sbr.rel (%p662) target = $region44
      $region43: #{tpu_custom_call.1} parent=5 // pred_region
        %s665 = ssub.s32 %s13, 2
        // Predicated region
        $region45: #{tpu_custom_call.1} parent=43 // pred_check
          %p666 = pneg %p147
        $region46: #{tpu_custom_call.1} parent=43 // pred_check_branch
          %668 = sbr.rel (%p666) target = $region48
        $region47: #{tpu_custom_call.1} parent=43 // pred_region
          %s669 = sand.u32 %s132, 1
          %s670 = scalar_lea.sflag [#allocation3], %s669
          %s671 = sand.u32 %s132, 1
          %s672 = smul.addr %s671, 16
          %s673 = scalar_lea.vmem [#allocation2], %s672
          %674 = dma.done %s670, 256
        $region48: #{tpu_custom_call.1} parent=43 // pred_fallthru
          _
      $region44: #{tpu_custom_call.1} parent=5 // pred_fallthru
        _
    $region6: #{tpu_custom_call.1} parent=1 // loop_footer
      %s17 = sadd.s32 1, %s13
    $region7: #{tpu_custom_call.1} parent=1 // loop_footer_branch
      %12 = sbr.rel target = $region3
    $region8: #{tpu_custom_call.1} parent=1 // loop_exit
      _
    %675 = vsyncpa [#allocation3], 1
    %s676 = scalar_lea.sflag [#allocation3], 1
    %677 = vsyncpa %s676, 1

</llo_original>
